<compile_context>
chip_gen: v6e
topology: v6e:2x2x1
jax: 0.10.0
libtpu: 0.0.40
codegen_flags: <defaults>
</compile_context>

<pallas_src>
import functools

import jax
import jax.numpy as jnp
from jax.experimental import pallas as pl
from jax.experimental.pallas import tpu as pltpu

EPS = 1e-5          # InstanceNorm eps (PyG default)
NEG_SLOPE = 0.01    # nn.LeakyReLU default negative_slope


# ----------------------------------------------------------------------------- kernel
def _mlp_graph_unit_kernel(x_ref, scale_ref, shift_ref, w1_ref, o_ref,
                           *, gpb, nroi, f_out):
    """One grid step = gpb graphs (gpb * nroi nodes).

    x_ref:     (gpb*nroi, d_in)    node features of this block of graphs (bf16)
    scale_ref: (gpb, f_out)        precomputed AdaIN style scale per graph (f32)
    shift_ref: (gpb, f_out)        precomputed AdaIN style shift per graph (f32)
    w1_ref:    (d_in, f_out)       self.l1 weight (bf16); bias cancels in InstanceNorm
    o_ref:     (gpb, nroi*f_out)   lane-dense output slab
    """
    # ---- self.l1 : single MXU matmul over all graphs in the block (f32 accumulate) ----
    h = jnp.dot(x_ref[...], w1_ref[...], preferred_element_type=jnp.float32)

    # ---- per-graph InstanceNorm statistics (centered, two-pass for numerics) ----------
    h3 = h.reshape(gpb, nroi, f_out)
    mean = jnp.mean(h3, axis=1, keepdims=True)              # (gpb, 1, F)
    c = h3 - mean                                            # centered
    var = jnp.mean(c * c, axis=1, keepdims=True)             # biased variance

    # ---- fused InstanceNorm (affine=False) + AdaIN affine -----------------------------
    a = scale_ref[...][:, None, :] * jax.lax.rsqrt(var + EPS)   # (gpb, 1, F), rsqrt on EUP
    out = a * c + shift_ref[...][:, None, :]                     # (gpb, nroi, F)

    # ---- LeakyReLU ---------------------------------------------------------------------
    out = jnp.maximum(out, NEG_SLOPE * out)

    # Lane-dense slab store: last dim nroi*f_out (multiple of 128 at typical sizes).
    o_ref[...] = out.reshape(gpb, nroi * f_out).astype(o_ref.dtype)


# ----------------------------------------------------------------------- tiling helpers
def _round_up(v, m):
    return -(-v // m) * m


def _device_info():
    """Chip-class tuning knobs (conservative fallback = v7x-like)."""
    try:
        kind = jax.devices()[0].device_kind.lower()
    except Exception:
        kind = ""
    if any(v in kind for v in ("v4", "v5", "v6")):
        # single TensorCore, 128 MiB physical VMEM: go big, few steps
        return {"n_cores": 1, "vmem_cap": 100 << 20, "budget": 80 << 20,
                "target_rows": 2048}
    # v7x (or unknown): 2 TensorCores, 64 MiB VMEM per TC: cap well below physical
    return {"n_cores": 2, "vmem_cap": 48 << 20, "budget": 36 << 20,
            "target_rows": 1024}


def _block_vmem_bytes(gpb, nroi, d_in, f_out, in_bytes=2):
    """Padding-aware f32/bf16 VMEM footprint of one grid step (incl. double buffers)."""
    rows = _round_up(gpb * nroi, 8)
    d_in_p = _round_up(d_in, 128)
    f_out_p = _round_up(f_out, 128)
    gpb_p = _round_up(gpb, 8)
    lane_o = _round_up(nroi * f_out, 128)
    b = 0
    b += 2 * rows * d_in_p * in_bytes            # x block (x2 buffers)
    b += 2 * gpb_p * lane_o * 4                  # output slab (x2 buffers)
    b += 2 * 2 * gpb_p * f_out_p * 4             # scale + shift blocks (x2 buffers)
    b += 2 * _round_up(d_in, 8) * f_out_p * in_bytes   # W1 (x2 buffers)
    b += 4 * rows * f_out_p * 4                  # f32 intermediates (h, centered, out, tmp)
    return b


def _choose_tiling(B, nroi, d_in, f_out, in_bytes=2):
    """Returns (gpb, b_pad, vmem_limit_bytes).

    Blocks must satisfy the (8,128) rule: either a single step with full-dim blocks
    (gpb == b_pad == B), or gpb a multiple of 8 (so the second-minor dims gpb and
    gpb*nroi of every block are sublane-aligned); graphs are zero-padded to b_pad.
    """
    info = _device_info()
    budget, target_rows, n_cores = info["budget"], info["target_rows"], info["n_cores"]

    def fits(g):
        return _block_vmem_bytes(g, nroi, d_in, f_out, in_bytes) <= budget

    total_rows = B * nroi
    if total_rows <= target_rows and fits(B):
        # Whole batch in one block (full-dim blocks: always legal).
        if n_cores == 2 and B % 16 == 0 and fits(B // 2):
            gpb, b_pad = B // 2, B           # 2 balanced steps for the 2 TensorCores
        else:
            gpb, b_pad = B, B
    else:
        gpb = 8
        while (2 * gpb * nroi <= target_rows and fits(2 * gpb)
               and 2 * gpb <= _round_up(B, 8)):
            gpb *= 2
        steps = pl.cdiv(B, gpb)
        if n_cores == 2 and steps % 2:
            steps += 1                        # even step count -> both v7x TCs busy
        b_pad = steps * gpb

    est = _block_vmem_bytes(gpb, nroi, d_in, f_out, in_bytes)
    vmem_limit = int(min(info["vmem_cap"], max(32 << 20, int(1.5 * est))))
    return gpb, b_pad, vmem_limit


# --------------------------------------------------------------------------- wrapper
def mlp_graph_unit(x, style_vector, nroi, params, *, compute_dtype=jnp.bfloat16):
    """x: [N, D_in] node features (N = B * nroi), style_vector: [B, style_dim]."""
    N, d_in = x.shape
    B, _ = style_vector.shape
    assert N == B * nroi, "each graph must have exactly nroi nodes"
    w1, b1, ws, bs, wh, bh = params
    f_out = w1.shape[1]
    out_dtype = x.dtype
    del b1  # l1 bias cancels exactly in InstanceNorm (mean subtraction); not needed.

    # Hoisted AdaIN style affine: two batched XLA matmuls, dense 2-D (B, f_out) f32.
    scale = (style_vector @ ws + bs).astype(jnp.float32)
    shift = (style_vector @ wh + bh).astype(jnp.float32)

    in_bytes = jnp.dtype(compute_dtype).itemsize
    gpb, b_pad, vmem_limit = _choose_tiling(B, nroi, d_in, f_out, in_bytes)

    x_c = x.astype(compute_dtype)
    w1_c = w1.astype(compute_dtype)
    if b_pad != B:
        pad_g = b_pad - B
        x_c = jnp.concatenate(
            [x_c, jnp.zeros((pad_g * nroi, d_in), compute_dtype)], axis=0)
        scale = jnp.concatenate([scale, jnp.zeros((pad_g, f_out), jnp.float32)], axis=0)
        shift = jnp.concatenate([shift, jnp.zeros((pad_g, f_out), jnp.float32)], axis=0)

    grid = (b_pad // gpb,)
    rows = gpb * nroi

    kernel = functools.partial(_mlp_graph_unit_kernel,
                               gpb=gpb, nroi=nroi, f_out=f_out)

    out2d = pl.pallas_call(
        kernel,
        out_shape=jax.ShapeDtypeStruct((b_pad, nroi * f_out), out_dtype),
        grid_spec=pltpu.PrefetchScalarGridSpec(
            num_scalar_prefetch=0,
            grid=grid,
            in_specs=[
                pl.BlockSpec((rows, d_in), lambda g: (g, 0)),      # x (per block of graphs)
                pl.BlockSpec((gpb, f_out), lambda g: (g, 0)),      # style scale
                pl.BlockSpec((gpb, f_out), lambda g: (g, 0)),      # style shift
                pl.BlockSpec((d_in, f_out), lambda g: (0, 0)),     # W1 (resident)
            ],
            out_specs=pl.BlockSpec((gpb, nroi * f_out), lambda g: (g, 0)),
        ),
        compiler_params=pltpu.CompilerParams(
            dimension_semantics=("parallel",),
            vmem_limit_bytes=vmem_limit,
        ),
    )(x_c, scale, shift, w1_c)

    # Same row-major bytes: (b_pad, nroi*f_out) -> (b_pad*nroi, f_out); drop padded graphs.
    return out2d.reshape(b_pad * nroi, f_out)[:N]


# ------------------------------------------------------------------------ reference
def _linear_init(key, fan_in, fan_out):
    """PyTorch nn.Linear default init: U(-1/sqrt(fan_in), 1/sqrt(fan_in))."""
    kw, kb = jax.random.split(key)
    bound = 1.0 / jnp.sqrt(fan_in)
    w = jax.random.uniform(kw, (fan_in, fan_out), jnp.float32, -bound, bound)
    b = jax.random.uniform(kb, (1, fan_out), jnp.float32, -bound, bound)
    return w, b


def reference(x, style_vector, nroi, params, *, compute_dtype=jnp.bfloat16):
    """Plain-JAX reference of the same forward pass (keeps the l1 bias, which the kernel
    drops because it cancels exactly inside InstanceNorm)."""
    w1, b1, ws, bs, wh, bh = params
    h = jnp.dot(x.astype(compute_dtype), w1.astype(compute_dtype),
                preferred_element_type=jnp.float32) + b1        # Linear
    B = style_vector.shape[0]
    f = h.shape[-1]
    h3 = h.reshape(B, nroi, f)
    mean = h3.mean(axis=1, keepdims=True)
    var = ((h3 - mean) ** 2).mean(axis=1, keepdims=True)
    normed = (h3 - mean) / jnp.sqrt(var + EPS)
    scale = (style_vector @ ws + bs)[:, None, :]
    shift = (style_vector @ wh + bh)[:, None, :]
    out = scale * normed + shift
    out = jnp.where(out >= 0, out, NEG_SLOPE * out)
    return out.reshape(B * nroi, f).astype(x.dtype)


if __name__ == "__main__":
    # Small shapes consistent with the module's forward.
    B, NROI = 2, 8            # 2 graphs, 8 nodes (ROIs) each
    D_IN, D_OUT = 16, 32      # input_size, output_size
    STYLE_DIM = 8

    key = jax.random.PRNGKey(0)
    kx, ksty, k1, k2, k3 = jax.random.split(key, 5)

    x = jax.random.normal(kx, (B * NROI, D_IN), jnp.float32)
    style_vector = jax.random.normal(ksty, (B, STYLE_DIM), jnp.float32)

    w1, b1 = _linear_init(k1, D_IN, D_OUT)        # self.l1
    ws, bs = _linear_init(k2, STYLE_DIM, D_OUT)   # AdaIN.style_scale
    wh, bh = _linear_init(k3, STYLE_DIM, D_OUT)   # AdaIN.style_shift
    params = (w1, b1, ws, bs, wh, bh)

    out = mlp_graph_unit(x, style_vector, NROI, params)
    out = jax.block_until_ready(out)

    ref = reference(x, style_vector, NROI, params)
    assert out.shape == (B * NROI, D_OUT)
    assert jnp.allclose(out, ref, atol=5e-4, rtol=5e-4), "mismatch vs reference"

    # TODO(synk): dropout (p>0) path not implemented (p=0 in this config); other
    # normalization_f options (batch/layer/graph) omitted — 'instance'+style (AdaIN) chosen.
    print("KERNEL_OK")
</pallas_src>

<mosaic_0001>
module attributes {stable_mosaic.version = 11 : i64} {
  func.func @_mlp_graph_unit_kernel(%arg0: i32, %arg1: memref<16x16xbf16, #tpu.memory_space<vmem>>, %arg2: memref<2x32xf32, #tpu.memory_space<vmem>>, %arg3: memref<2x32xf32, #tpu.memory_space<vmem>>, %arg4: memref<16x32xbf16, #tpu.memory_space<vmem>>, %arg5: memref<2x256xf32, #tpu.memory_space<vmem>>) attributes {dimension_semantics = [#tpu.dimension_semantics<parallel>], iteration_bounds = array<i64: 1>, scalar_prefetch = 0 : i64, scratch_operands = 0 : i64, tpu.core_type = #tpu.core_type<tc>, window_params = [{transform_indices = @transform_0, window_bounds = array<i64: 16, 16>}, {transform_indices = @transform_1, window_bounds = array<i64: 2, 32>}, {transform_indices = @transform_2, window_bounds = array<i64: 2, 32>}, {pipeline_mode = #tpu.pipeline_mode<synchronous>, transform_indices = @transform_3, window_bounds = array<i64: 16, 32>}, {transform_indices = @transform_4, window_bounds = array<i64: 2, 256>}]} {
    %c0 = arith.constant 0 : index
    %c0_0 = arith.constant 0 : index
    %0 = vector.load %arg1[%c0, %c0_0] : memref<16x16xbf16, #tpu.memory_space<vmem>>, vector<16x16xbf16>
    %c0_1 = arith.constant 0 : index
    %c0_2 = arith.constant 0 : index
    %1 = vector.load %arg4[%c0_1, %c0_2] : memref<16x32xbf16, #tpu.memory_space<vmem>>, vector<16x32xbf16>
    %cst = arith.constant dense<0.000000e+00> : vector<16x32xf32>
    %2 = tpu.matmul %0, %1, %cst {dimension_numbers = #tpu.dot_dimension_numbers<[1], [0], [0], [1], [0, 0, 1, 1], [], []>} : vector<16x16xbf16>, vector<16x32xbf16>, vector<16x32xf32> -> vector<16x32xf32>
    %3 = vector.shape_cast %2 : vector<16x32xf32> to vector<2x8x32xf32>
    %cst_3 = arith.constant dense<0.000000e+00> : vector<2x32xf32>
    %4 = vector.multi_reduction <add>, %3, %cst_3 [1] : vector<2x8x32xf32> to vector<2x32xf32>
    %5 = vector.shape_cast %4 : vector<2x32xf32> to vector<2x1x32xf32>
    %cst_4 = arith.constant 8.000000e+00 : f32
    %6 = vector.broadcast %cst_4 : f32 to vector<2x1x32xf32>
    %7 = arith.divf %5, %6 : vector<2x1x32xf32>
    %8 = vector.broadcast %7 : vector<2x1x32xf32> to vector<2x8x32xf32>
    %9 = arith.subf %3, %8 : vector<2x8x32xf32>
    %10 = arith.mulf %9, %9 : vector<2x8x32xf32>
    %cst_5 = arith.constant dense<0.000000e+00> : vector<2x32xf32>
    %11 = vector.multi_reduction <add>, %10, %cst_5 [1] : vector<2x8x32xf32> to vector<2x32xf32>
    %12 = vector.shape_cast %11 : vector<2x32xf32> to vector<2x1x32xf32>
    %cst_6 = arith.constant 8.000000e+00 : f32
    %13 = vector.broadcast %cst_6 : f32 to vector<2x1x32xf32>
    %14 = arith.divf %12, %13 : vector<2x1x32xf32>
    %c0_7 = arith.constant 0 : index
    %c0_8 = arith.constant 0 : index
    %15 = vector.load %arg2[%c0_7, %c0_8] : memref<2x32xf32, #tpu.memory_space<vmem>>, vector<2x32xf32>
    %16 = vector.shape_cast %15 : vector<2x32xf32> to vector<2x1x32xf32>
    %cst_9 = arith.constant 9.99999974E-6 : f32
    %17 = vector.broadcast %cst_9 : f32 to vector<2x1x32xf32>
    %18 = arith.addf %14, %17 : vector<2x1x32xf32>
    %19 = math.rsqrt %18 : vector<2x1x32xf32>
    %20 = arith.mulf %16, %19 : vector<2x1x32xf32>
    %21 = vector.broadcast %20 : vector<2x1x32xf32> to vector<2x8x32xf32>
    %22 = arith.mulf %21, %9 : vector<2x8x32xf32>
    %c0_10 = arith.constant 0 : index
    %c0_11 = arith.constant 0 : index
    %23 = vector.load %arg3[%c0_10, %c0_11] : memref<2x32xf32, #tpu.memory_space<vmem>>, vector<2x32xf32>
    %24 = vector.shape_cast %23 : vector<2x32xf32> to vector<2x1x32xf32>
    %25 = vector.broadcast %24 : vector<2x1x32xf32> to vector<2x8x32xf32>
    %26 = arith.addf %22, %25 : vector<2x8x32xf32>
    %cst_12 = arith.constant 0.00999999977 : f32
    %27 = vector.broadcast %cst_12 : f32 to vector<2x8x32xf32>
    %28 = arith.mulf %27, %26 : vector<2x8x32xf32>
    %29 = arith.maximumf %26, %28 : vector<2x8x32xf32>
    %30 = vector.shape_cast %29 : vector<2x8x32xf32> to vector<2x256xf32>
    %c0_13 = arith.constant 0 : index
    %c0_14 = arith.constant 0 : index
    %31 = vector.load %arg5[%c0_13, %c0_14] : memref<2x256xf32, #tpu.memory_space<vmem>>, vector<2x256xf32>
    tpu.vector_store %arg5[%c0_13, %c0_14], %30 {strides = array<i32>} : memref<2x256xf32, #tpu.memory_space<vmem>>, vector<2x256xf32>,
    return
  }
  func.func @transform_0(%arg0: i32) -> (i32, i32) {
    %c0_i32 = arith.constant 0 : i32
    %c0_i32_0 = arith.constant 0 : i32
    return %arg0, %c0_i32 : i32, i32
  }
  func.func @transform_1(%arg0: i32) -> (i32, i32) {
    %c0_i32 = arith.constant 0 : i32
    %c0_i32_0 = arith.constant 0 : i32
    return %arg0, %c0_i32 : i32, i32
  }
  func.func @transform_2(%arg0: i32) -> (i32, i32) {
    %c0_i32 = arith.constant 0 : i32
    %c0_i32_0 = arith.constant 0 : i32
    return %arg0, %c0_i32 : i32, i32
  }
  func.func @transform_3(%arg0: i32) -> (i32, i32) {
    %c0_i32 = arith.constant 0 : i32
    %c0_i32_0 = arith.constant 0 : i32
    %c0_i32_1 = arith.constant 0 : i32
    return %c0_i32, %c0_i32_0 : i32, i32
  }
  func.func @transform_4(%arg0: i32) -> (i32, i32) {
    %c0_i32 = arith.constant 0 : i32
    %c0_i32_0 = arith.constant 0 : i32
    return %arg0, %c0_i32 : i32, i32
  }
}

</mosaic_0001>

<llo_original>
// kernel: tpu_custom_call.1
$region0: #{tpu_custom_call.1}
  #allocation0 [shape = 'u32[]', space=smem, size = 0x4, offset = 0x4, fixed_abs, tag = 'smem constant byte address 0x4 - core index']
  #allocation1 [shape = 'u32[144,128]{1,0:T(1,128)}', space=vmem, size = 0x12000, scoped, tag = 'internal scratch']
  %s0 = inlined_call_operand.hbm [shape: bf16[16,16], index: 0, kind: input, shape index: {}]
  %s1 = inlined_call_operand.hbm [shape: f32[2,32], index: 1, kind: input, shape index: {}]
  %s2 = inlined_call_operand.vmem [shape: f32[2,32], index: 2, kind: input, shape index: {}]
  %s3 = inlined_call_operand.hbm [shape: bf16[16,32], index: 3, kind: input, shape index: {}]
  %s4 = inlined_call_operand.hbm [shape: f32[2,256], index: 4, kind: output, shape index: {}]
  %s5 = sld [smem:[#allocation0]]
  $region38: #{tpu_custom_call.1} parent=0
    _
  %s7 = ssub.s32 1, %s5
  %s8 = scalar_select 0, %s7, %s5
  $region1: #{tpu_custom_call.1} parent=0
    #allocation2 [shape = 'u8[4096]{0}', space=vmem, size = 0x1000, scoped, tag = 'input window, operand 0, single buffered']
    #allocation3 [shape = 's32[1]{0}', space=sflag, size = 0x4, scoped, tag = 'scoped memory for tpu_custom_call.1']
    #allocation4 [shape = 's32[1]{0}', space=sflag, size = 0x4, scoped, tag = 'scoped memory for tpu_custom_call.1']
    #allocation5 [shape = 'u8[1024]{0}', space=vmem, size = 0x400, scoped, tag = 'input window, operand 1, single buffered']
    #allocation6 [shape = 's32[1]{0}', space=sflag, size = 0x4, scoped, tag = 'scoped memory for tpu_custom_call.1']
    #allocation7 [shape = 'u8[4096]{0}', space=vmem, size = 0x1000, scoped, tag = 'input window, operand 3, single buffered']
    #allocation8 [shape = 'u8[2048]{0}', space=vmem, size = 0x800, scoped, tag = 'output window, operand 0, single buffered']
    %9 = vsyncpa [#allocation3], 0
    %10 = vsyncpa [#allocation6], 0
    %11 = vsyncpa [#allocation4], 0
    // Predicated region
    $region2: #{tpu_custom_call.1} parent=1 // pred_check
      _
    $region3: #{tpu_custom_call.1} parent=1 // pred_check_branch
      %13 = sbr.rel (0) target = $region5
    $region4: #{tpu_custom_call.1} parent=1 // pred_region
      %s15 = ssub.s32 128, 128
      %16 = vsyncadd [#allocation3], %s15
      %s17 = sshll.u32 [#allocation2], 4
      %s18 = int_to_ptr.vmem [resolvable:$true] %s17
      %23 = dma.hbm_to_vmem [thread:$0]  %s0, 128, %s18, [#allocation3], 64, 64, 4
    $region5: #{tpu_custom_call.1} parent=1 // pred_fallthru
      _
    // Predicated region
    $region6: #{tpu_custom_call.1} parent=1 // pred_check
      _
    $region7: #{tpu_custom_call.1} parent=1 // pred_check_branch
      %25 = sbr.rel (0) target = $region9
    $region8: #{tpu_custom_call.1} parent=1 // pred_region
      %s27 = ssub.s32 32, 32
      %28 = vsyncadd [#allocation6], %s27
      %s30 = sshll.u32 [#allocation5], 4
      %s31 = int_to_ptr.vmem [resolvable:$true] %s30
      %33 = dma.hbm_to_vmem [thread:$0]  %s1, 32, %s31, [#allocation6]
    $region9: #{tpu_custom_call.1} parent=1 // pred_fallthru
      _
    // Predicated region
    $region10: #{tpu_custom_call.1} parent=1 // pred_check
      _
    $region11: #{tpu_custom_call.1} parent=1 // pred_check_branch
      %35 = sbr.rel (0) target = $region13
    $region12: #{tpu_custom_call.1} parent=1 // pred_region
      _
    $region13: #{tpu_custom_call.1} parent=1 // pred_fallthru
      _
    // Predicated region
    $region14: #{tpu_custom_call.1} parent=1 // pred_check
      _
    $region15: #{tpu_custom_call.1} parent=1 // pred_check_branch
      %37 = sbr.rel (0) target = $region17
    $region16: #{tpu_custom_call.1} parent=1 // pred_region
      %s39 = ssub.s32 128, 128
      %40 = vsyncadd [#allocation6], %s39
      %s41 = sshll.u32 [#allocation7], 4
      %s42 = int_to_ptr.vmem [resolvable:$true] %s41
      %47 = dma.hbm_to_vmem [thread:$0]  %s3, 128, %s42, [#allocation6], 64, 64, 4
    $region17: #{tpu_custom_call.1} parent=1 // pred_fallthru
      _
    // Predicated region
    $region18: #{tpu_custom_call.1} parent=1 // pred_check
      _
    $region19: #{tpu_custom_call.1} parent=1 // pred_check_branch
      %49 = sbr.rel (0) target = $region21
    $region20: #{tpu_custom_call.1} parent=1 // pred_region
      %50 = dma.done [#allocation3], 128
    $region21: #{tpu_custom_call.1} parent=1 // pred_fallthru
      _
    // Predicated region
    $region22: #{tpu_custom_call.1} parent=1 // pred_check
      _
    $region23: #{tpu_custom_call.1} parent=1 // pred_check_branch
      %52 = sbr.rel (0) target = $region25
    $region24: #{tpu_custom_call.1} parent=1 // pred_region
      %53 = dma.done [#allocation6], 32
    $region25: #{tpu_custom_call.1} parent=1 // pred_fallthru
      _
    // Predicated region
    $region26: #{tpu_custom_call.1} parent=1 // pred_check
      _
    $region27: #{tpu_custom_call.1} parent=1 // pred_check_branch
      %55 = sbr.rel (0) target = $region29
    $region28: #{tpu_custom_call.1} parent=1 // pred_region
      %56 = dma.done [#allocation6], 128
    $region29: #{tpu_custom_call.1} parent=1 // pred_fallthru
      _
    %v58 = vld [vmem:[#allocation2] sm:$0xf]
    %v59 = vld [vmem:[#allocation2 + $0x4] sm:$0xf]
    %v60 = vld [vmem:[#allocation7] sm:$0xf]
    %v61 = vld [vmem:[#allocation7 + $0x4] sm:$0xf]
    %v64 = vunpack.c.l.b16 %v58
    %v65 = vunpack.c.l.b16 %v59
    %v66 = vpack.c.b16 %v65, %v64
    %v69 = vunpack.c.l.b16 %v60
    %v70 = vunpack.c.l.b16 %v61
    %v71 = vpack.c.b16 %v70, %v69
    %vm73 = vcmask 130048
    %v75 = vsel %vm73, %v66, 0
    %77 = vmatprep.subr.bf16.mxu0 0
    %78 = vmatpush1.bf16.msra.mxu0 0
    %79 = vmatprep.subr.bf16.mxu0 0
    %80 = vmatpush1.bf16.msra.mxu0 0
    %81 = vmatprep.subr.bf16.mxu0 0
    %82 = vmatpush1.bf16.msra.mxu0 0
    %83 = vmatprep.subr.bf16.mxu0 0
    %84 = vmatpush1.bf16.msra.mxu0 0
    %85 = vmatprep.subr.bf16.mxu0 0
    %86 = vmatpush1.bf16.msra.mxu0 0
    %87 = vmatprep.subr.bf16.mxu0 0
    %88 = vmatpush1.bf16.msra.mxu0 0
    %89 = vmatprep.subr.bf16.mxu0 0
    %90 = vmatpush1.bf16.msra.mxu0 0
    %91 = vmatprep.subr.bf16.mxu0 0
    %92 = vmatpush1.bf16.msra.mxu0 %v71
    %93 = vmatprep.subr.bf16.mxu0 0
    %94 = vmatpush2.bf16.msra.mxu0 0
    %95 = vmatprep.subr.bf16.mxu0 0
    %96 = vmatpush2.bf16.msra.mxu0 0
    %97 = vmatprep.subr.bf16.mxu0 0
    %98 = vmatpush2.bf16.msra.mxu0 0
    %99 = vmatprep.subr.bf16.mxu0 0
    %100 = vmatpush2.bf16.msra.mxu0 0
    %101 = vmatprep.subr.bf16.mxu0 0
    %102 = vmatpush2.bf16.msra.mxu0 0
    %103 = vmatprep.subr.bf16.mxu0 0
    %104 = vmatpush2.bf16.msra.mxu0 0
    %105 = vmatprep.subr.bf16.mxu0 0
    %106 = vmatpush2.bf16.msra.mxu0 0
    %107 = vmatprep.subr.bf16.mxu0 0
    %108 = vmatpush2.bf16.msra.mxu0 0
    %109 = vmatprep.mubr.bf16.mxu0 0
    %110 = vmatmul.mubr.bf16.gmra.mxu0 %v75
    %v111 = vpop.f32.mrf.mxu0
    %v112 = vadd.f32 0.0, %v111
    %v113 = vpop.f32.mrf.mxu0
    %v114 = vpop.f32.mrf.mxu0
    %v115 = vadd.f32 0.0, %v114
    %v116 = vpop.f32.mrf.mxu0
    %117 = vdwg.mxu0
    %vm118 = vcmask 261120
    %v119 = vsel %vm118, %v112, 0.0
    %v120 = vrot.slane %v119, 4
    %v121 = vadd.f32 %v119, %v120
    %v122 = vrot.slane %v121, 2
    %v123 = vadd.f32 %v121, %v122
    %v124 = vrot.slane %v123, 1
    %v125 = vadd.f32 %v123, %v124
    %v126 = vsel %vm118, %v115, 0.0
    %v127 = vrot.slane %v126, 4
    %v128 = vadd.f32 %v126, %v127
    %v129 = vrot.slane %v128, 2
    %v130 = vadd.f32 %v128, %v129
    %v131 = vrot.slane %v130, 1
    %v132 = vadd.f32 %v130, %v131
    %v133 = vrcp.pop 8.0
    %v134 = vmul.f32 %v125, %v133
    %v135 = vmul.f32 %v132, %v133
    %v136 = vsub.f32 %v112, %v134
    %v137 = vsub.f32 %v115, %v135
    %v138 = vmul.f32 %v136, %v136
    %v139 = vmul.f32 %v137, %v137
    %v140 = vsel %vm118, %v138, 0.0
    %v141 = vrot.slane %v140, 4
    %v142 = vadd.f32 %v140, %v141
    %v143 = vrot.slane %v142, 2
    %v144 = vadd.f32 %v142, %v143
    %v145 = vrot.slane %v144, 1
    %v146 = vadd.f32 %v144, %v145
    %v147 = vsel %vm118, %v139, 0.0
    %v148 = vrot.slane %v147, 4
    %v149 = vadd.f32 %v147, %v148
    %v150 = vrot.slane %v149, 2
    %v151 = vadd.f32 %v149, %v150
    %v152 = vrot.slane %v151, 1
    %v153 = vadd.f32 %v151, %v152
    %v154 = vmul.f32 %v146, %v133
    %v155 = vmul.f32 %v153, %v133
    %v156 = vld [vmem:[#allocation5] sm:$0x3]
    %v159 = vunpack.c.l.s4 1966171168
    %v160 = vunpack.c.0.s8 %v159
    %v161 = vlaneseq
    %v162 = vshrl.u32 %v161, 7
    %v163 = vsub.s32 %v160, %v162
    %v164 = vrot.slane %v156, %v163
    %v165 = vcombine.high %v164, %v164
    %v167 = vunpack.c.l.s4 1966171168
    %v168 = vunpack.c.0.s8 %v167
    %v169 = vlaneseq
    %v170 = vshrl.u32 %v169, 7
    %v171 = vsub.s32 %v168, %v170
    %v172 = vrot.slane %v164, %v171
    %v174 = vunpack.c.l.s4 1966171168
    %v175 = vunpack.c.0.s8 %v174
    %v176 = vlaneseq
    %v177 = vshrl.u32 %v176, 7
    %v178 = vsub.s32 %v175, %v177
    %v179 = vrot.slane %v165, %v178
    %v182 = vadd.f32 %v154, 1e-05
    %v183 = vadd.f32 %v155, 1e-05
    %v184 = vrsqrt.pop %v182
    %v185 = vrsqrt.pop %v183
    %v186 = vmul.f32 %v172, %v184
    %v187 = vmul.f32 %v179, %v185
    %v190 = vlaneseq
    %v191 = vshrl.u32 %v190, 7
    %v192 = vsub.s32 0, %v191
    %v193 = vrot.slane %v186, %v192
    %v194 = vlaneseq
    %v195 = vshrl.u32 %v194, 7
    %v196 = vsub.s32 0, %v195
    %v197 = vrot.slane %v187, %v196
    %v200 = vmul.f32 %v193, %v136
    %v201 = vmul.f32 %v197, %v137
    %v202 = vld [vmem:[%s2] sm:$0x3]
    %v205 = vunpack.c.l.s4 1966171168
    %v206 = vunpack.c.0.s8 %v205
    %v207 = vlaneseq
    %v208 = vshrl.u32 %v207, 7
    %v209 = vsub.s32 %v206, %v208
    %v210 = vrot.slane %v202, %v209
    %v211 = vcombine.high %v210, %v210
    %v213 = vunpack.c.l.s4 1966171168
    %v214 = vunpack.c.0.s8 %v213
    %v215 = vlaneseq
    %v216 = vshrl.u32 %v215, 7
    %v217 = vsub.s32 %v214, %v216
    %v218 = vrot.slane %v210, %v217
    %v220 = vunpack.c.l.s4 1966171168
    %v221 = vunpack.c.0.s8 %v220
    %v222 = vlaneseq
    %v223 = vshrl.u32 %v222, 7
    %v224 = vsub.s32 %v221, %v223
    %v225 = vrot.slane %v211, %v224
    %v226 = vlaneseq
    %v227 = vshrl.u32 %v226, 7
    %v228 = vsub.s32 0, %v227
    %v229 = vrot.slane %v218, %v228
    %v230 = vlaneseq
    %v231 = vshrl.u32 %v230, 7
    %v232 = vsub.s32 0, %v231
    %v233 = vrot.slane %v225, %v232
    %v236 = vadd.f32 %v200, %v229
    %v237 = vadd.f32 %v201, %v233
    %v238 = vmul.f32 %v236, 0.01
    %v239 = vmul.f32 %v237, 0.01
    %v240 = vmax.f32 %v236, %v238
    %v241 = vmax.f32 %v237, %v239
    %v242 = vcombine.high %v240, 0.0
    %v244 = vunpack.c.l.s4 1983009808
    %v245 = vunpack.c.0.s8 %v244
    %v246 = vlaneseq
    %v247 = vshrl.u32 %v246, 7
    %v248 = vsub.s32 %v245, %v247
    %v249 = vrot.slane %v240, %v248
    %v251 = vunpack.c.l.s4 1983009808
    %v252 = vunpack.c.0.s8 %v251
    %v253 = vlaneseq
    %v254 = vshrl.u32 %v253, 7
    %v255 = vsub.s32 %v252, %v254
    %v256 = vrot.slane %v242, %v255
    %v257 = vcombine.high %v241, 0.0
    %v259 = vunpack.c.l.s4 1983009808
    %v260 = vunpack.c.0.s8 %v259
    %v261 = vlaneseq
    %v262 = vshrl.u32 %v261, 7
    %v263 = vsub.s32 %v260, %v262
    %v264 = vrot.slane %v241, %v263
    %v266 = vunpack.c.l.s4 1983009808
    %v267 = vunpack.c.0.s8 %v266
    %v268 = vlaneseq
    %v269 = vshrl.u32 %v268, 7
    %v270 = vsub.s32 %v267, %v269
    %v271 = vrot.slane %v257, %v270
    %v272 = vcombine.low %v249, %v264
    %v273 = vcombine.high %v249, %v264
    %v275 = vunpack.c.l.s4 1934713408
    %v276 = vunpack.c.0.s8 %v275
    %v277 = vlaneseq
    %v278 = vshrl.u32 %v277, 7
    %v279 = vsub.s32 %v276, %v278
    %v280 = vrot.slane %v272, %v279
    %v282 = vunpack.c.l.s4 1934713408
    %v283 = vunpack.c.0.s8 %v282
    %v284 = vlaneseq
    %v285 = vshrl.u32 %v284, 7
    %v286 = vsub.s32 %v283, %v285
    %v287 = vrot.slane %v273, %v286
    %v288 = vcombine.low %v256, %v271
    %v289 = vcombine.high %v256, %v271
    %v291 = vunpack.c.l.s4 1934713408
    %v292 = vunpack.c.0.s8 %v291
    %v293 = vlaneseq
    %v294 = vshrl.u32 %v293, 7
    %v295 = vsub.s32 %v292, %v294
    %v296 = vrot.slane %v288, %v295
    %v298 = vunpack.c.l.s4 1934713408
    %v299 = vunpack.c.0.s8 %v298
    %v300 = vlaneseq
    %v301 = vshrl.u32 %v300, 7
    %v302 = vsub.s32 %v299, %v301
    %v303 = vrot.slane %v289, %v302
    %v304 = vcombine.high %v280, 0.0
    %v305 = vcombine.high %v287, 0.0
    %v306 = vcombine.high %v296, 0.0
    %v307 = vcombine.high %v303, 0.0
    %309 = vrot.lane.b32.xlu0 %v304, 32
    %v310 = vpop.permute.xlu0 %309
    %313 = vrot.lane.b32.xlu0 %v287, 64
    %v314 = vpop.permute.xlu0 %313
    %317 = vrot.lane.b32.xlu0 %v305, 96
    %v318 = vpop.permute.xlu0 %317
    %321 = vrot.lane.b32.xlu0 %v306, 32
    %v322 = vpop.permute.xlu0 %321
    %325 = vrot.lane.b32.xlu0 %v303, 64
    %v326 = vpop.permute.xlu0 %325
    %329 = vrot.lane.b32.xlu0 %v307, 96
    %v330 = vpop.permute.xlu0 %329
    %v332 = vsel %vm118, %v280, %v310
    %vm333 = vcmask 523264
    %v334 = vsel %vm333, %v332, %v314
    %vm335 = vcmask 785408
    %v336 = vsel %vm335, %v334, %v318
    %v337 = vsel %vm118, %v296, %v322
    %v338 = vsel %vm333, %v337, %v326
    %v339 = vsel %vm335, %v338, %v330
    %v342 = vcombine.low %v336, %v339
    %v344 = vunpack.c.l.s4 1983009808
    %v345 = vunpack.c.0.s8 %v344
    %v346 = vlaneseq
    %v347 = vshrl.u32 %v346, 7
    %v348 = vsub.s32 %v345, %v347
    %v349 = vrot.slane %v342, %v348
    %351 = vst [vmem:[#allocation8] sm:$0xf] %v349
    // Predicated region
    $region30: #{tpu_custom_call.1} parent=1 // pred_check
      _
    $region31: #{tpu_custom_call.1} parent=1 // pred_check_branch
      %353 = sbr.rel (0) target = $region33
    $region32: #{tpu_custom_call.1} parent=1 // pred_region
      %s355 = ssub.s32 64, 64
      %356 = vsyncadd [#allocation4], %s355
      %s358 = sshll.u32 [#allocation8], 4
      %s359 = int_to_ptr.vmem [resolvable:$true] %s358
      %361 = dma.vmem_to_hbm [thread:$0]  %s359, 64, %s4, [#allocation4]
    $region33: #{tpu_custom_call.1} parent=1 // pred_fallthru
      _
    // Predicated region
    $region34: #{tpu_custom_call.1} parent=1 // pred_check
      _
    $region35: #{tpu_custom_call.1} parent=1 // pred_check_branch
      %363 = sbr.rel (0) target = $region37
    $region36: #{tpu_custom_call.1} parent=1 // pred_region
      %364 = dma.done [#allocation4], 64
    $region37: #{tpu_custom_call.1} parent=1 // pred_fallthru
      _
    %365 = vsyncpa [#allocation3], 1
    %366 = vsyncpa [#allocation6], 1
    %367 = vsyncpa [#allocation4], 1

</llo_original>
